<compile_context>
chip_gen: v7x
topology: tpu7x:2x2x1
jax: 0.10.0
libtpu: 0.0.40
codegen_flags: <defaults>
</compile_context>

<pallas_src>
import functools

import jax
import jax.numpy as jnp
import numpy as np
from jax.experimental import pallas as pl
from jax.experimental.pallas import tpu as pltpu


def _deconv_prelu_kernel(x_ref, w_ref, b_ref, alpha_ref, o_ref, xcol_ref, *,
                         H, W, Cin):
  """One batch element of ConvTranspose2d(k=4, s=2, p=1) + bias + PReLU.

  The stride-2 deconv is split into 4 output sub-pixel phases
  (p, q) = parity of (oh, ow); each phase is a 2x2 conv over the input, and
  all 4 phases are computed with a single MXU contraction against a 9-shift
  im2col of the input:

    out[(2p+q)*Cout + co, m*W + nn] =
        sum_{ci,dh,dw} Wbig[(2p+q)*Cout+co, sidx(dh,dw)*Cin+ci] * x[ci, m+dh, nn+dw]

  Refs:
    x_ref     (1, Cin, H*W)    f32   spatial flattened on the lane axis
    w_ref     (4*Cout, Kpad)   bf16  packed phase weights (Kpad >= 9*Cin)
    b_ref     (4*Cout, 1)      f32   bias replicated per phase
    alpha_ref (1,)             f32   PReLU slope (SMEM)
    o_ref     (1, 4*Cout, H*W) f32   phase-major output (lane-dense stores)
    xcol_ref  (Kpad, H*W)      f32   VMEM scratch: 9-shift im2col of the input
  """
  HW = H * W

  # Build the 9-shift im2col in VMEM with windowed loads/stores only; the
  # out-of-image halo stays zero (no padded activation tensor, no offset-1
  # full-tensor interior writes).
  xcol_ref[...] = jnp.zeros_like(xcol_ref)
  sidx = 0
  for dh in (-1, 0, 1):
    for dw in (-1, 0, 1):
      off = dh * W + dw                 # shift in flattened (m, nn) space
      dst0 = max(0, -off)               # first valid destination lane
      src0 = max(0, off)                # = dst0 + off
      length = HW - abs(off)
      v = x_ref[0, :, pl.ds(src0, length)]            # (Cin, length) f32
      if dw != 0:
        # Mask destinations whose in-row neighbour falls outside [0, W).
        col = (dst0 + jax.lax.broadcasted_iota(
            jnp.int32, (Cin, length), 1)) % W
        v = jnp.where((col + dw >= 0) & (col + dw < W), v, 0.0)
      xcol_ref[pl.ds(sidx * Cin, Cin), pl.ds(dst0, length)] = v
      sidx += 1

  # One fused GEMM: (4*Cout, Kpad) @ (Kpad, H*W) -> (4*Cout, H*W),
  # bf16 operands, f32 accumulation.
  xcol = xcol_ref[...].astype(jnp.bfloat16)
  acc = jnp.dot(w_ref[...], xcol, preferred_element_type=jnp.float32)

  z = acc + b_ref[...]                  # bias in exact f32
  alpha = alpha_ref[0]
  o_ref[0] = jnp.where(z >= 0.0, z, alpha * z)        # PReLU


def _pack_deconv_params(weight, bias):
  """Pack torch ConvTranspose2d(k=4, s=2, p=1) params for the phase GEMM.

  weight: (Cin, Cout, 4, 4) (torch ConvTranspose2d layout), bias: (Cout,).
  Returns w_big (4*Cout, Kpad) bf16 and b_big (4*Cout, 1) f32 with
    w_big[(2p+q)*Cout + co, sidx*Cin + ci] = weight[ci, co, 1+p-2dh, 1+q-2dw]
  for sidx = (dh+1)*3 + (dw+1), and zero when the tap index leaves [0, 4).
  """
  Cin, Cout, KH, KW = weight.shape
  assert (KH, KW) == (4, 4), "specialised to kernel_size=4, stride=2, padding=1"
  K = 9 * Cin
  Kpad = ((K + 7) // 8) * 8

  rows = []
  for p in (0, 1):
    for q in (0, 1):
      cols = []
      for dh in (-1, 0, 1):
        for dw in (-1, 0, 1):
          kh = 1 + p - 2 * dh
          kw = 1 + q - 2 * dw
          if 0 <= kh < 4 and 0 <= kw < 4:
            cols.append(weight[:, :, kh, kw].T)          # (Cout, Cin)
          else:
            cols.append(jnp.zeros((Cout, Cin), weight.dtype))
      rows.append(jnp.concatenate(cols, axis=1))         # (Cout, 9*Cin)
  w_big = jnp.concatenate(rows, axis=0)                  # (4*Cout, 9*Cin)
  if Kpad != K:
    w_big = jnp.concatenate(
        [w_big, jnp.zeros((w_big.shape[0], Kpad - K), w_big.dtype)], axis=1)
  b_big = jnp.tile(bias, 4).reshape(4 * Cout, 1)
  return w_big.astype(jnp.bfloat16), b_big.astype(jnp.float32)


@jax.jit
def deconv_block_pallas(x, weight, bias, alpha):
  """DeconvBlock forward: ConvTranspose2d(Cin->Cout, 4, 2, 1) + bias -> PReLU.

  x: (N, Cin, H, W) NCHW (PyTorch convention); returns (N, Cout, 2H, 2W) f32.
  """
  # TODO(synk): specialised to the module defaults (kernel_size=4, stride=2,
  # padding=1, norm=None, activation='prelu'); other configs need a different
  # phase decomposition / extra epilogues.
  N, Cin, H, W = x.shape
  _, Cout, _, _ = weight.shape
  HW = H * W

  w_big, b_big = _pack_deconv_params(weight, bias)
  Kpad = w_big.shape[1]

  # NCHW needs no transpose: flattening (H, W) is a free reshape and puts the
  # spatial axis on the lanes.
  x_flat = x.reshape(N, Cin, HW).astype(jnp.float32)
  alpha_arr = jnp.asarray(alpha, jnp.float32).reshape(1)

  kernel = functools.partial(_deconv_prelu_kernel, H=H, W=W, Cin=Cin)

  r = pl.pallas_call(
      kernel,
      out_shape=jax.ShapeDtypeStruct((N, 4 * Cout, HW), jnp.float32),
      grid=(N,),      # batch-parallel grid: pipelines and megacore-shards
      in_specs=[
          pl.BlockSpec((1, Cin, HW), lambda n: (n, 0, 0)),
          pl.BlockSpec((4 * Cout, Kpad), lambda n: (0, 0)),
          pl.BlockSpec((4 * Cout, 1), lambda n: (0, 0)),
          pl.BlockSpec(memory_space=pltpu.MemorySpace.SMEM),
      ],
      out_specs=pl.BlockSpec((1, 4 * Cout, HW), lambda n: (n, 0, 0)),
      scratch_shapes=[pltpu.VMEM((Kpad, HW), jnp.float32)],
      compiler_params=pltpu.CompilerParams(
          dimension_semantics=("parallel",)),
  )(x_flat, w_big, b_big, alpha_arr)

  # Sub-pixel interleave (n, p, q, co, m, nn) -> (n, co, 2m+p, 2nn+q).
  # TODO(synk): this final stride-2 interleave is left to XLA (one small
  # reshape/transpose); doing it in-kernel would require strided lane stores.
  r = r.reshape(N, 2, 2, Cout, H, W)
  return jnp.transpose(r, (0, 3, 4, 1, 5, 2)).reshape(N, Cout, 2 * H, 2 * W)


# ---------------- pure-JAX reference (independent of the kernel math) --------
def _reference(x, weight, bias, alpha):
  # ConvTranspose2d(k=4, s=2, p=1) == lhs-dilated conv with the flipped kernel.
  w_oihw = jnp.transpose(jnp.flip(weight, axis=(2, 3)), (1, 0, 2, 3))
  y = jax.lax.conv_general_dilated(
      x.astype(jnp.float32), w_oihw.astype(jnp.float32),
      window_strides=(1, 1), padding=((2, 2), (2, 2)),
      lhs_dilation=(2, 2),
      dimension_numbers=('NCHW', 'OIHW', 'NCHW'),
      precision=jax.lax.Precision.HIGHEST)
  y = y + bias.reshape(1, -1, 1, 1)
  return jnp.where(y >= 0, y, alpha * y)      # PReLU


if __name__ == "__main__":
  # DeconvBlock(input_size=4, output_size=4) with torch defaults:
  # kernel_size=4, stride=2, padding=1, bias=True, activation='prelu', norm=None.
  N, Cin, Cout, H, W = 2, 4, 4, 16, 16
  key = jax.random.PRNGKey(0)
  kx, kw, kb = jax.random.split(key, 3)

  x = jax.random.normal(kx, (N, Cin, H, W), jnp.float32)
  bound = 1.0 / np.sqrt(Cin * 4 * 4)
  weight = jax.random.uniform(kw, (Cin, Cout, 4, 4), jnp.float32, -bound, bound)
  bias = jax.random.uniform(kb, (Cout,), jnp.float32, -bound, bound)
  alpha = jnp.float32(0.25)                   # torch.nn.PReLU() default slope

  out = deconv_block_pallas(x, weight, bias, alpha)
  out = jax.block_until_ready(out)

  ref = _reference(x, weight, bias, alpha)
  # bf16 MXU operands (f32 accumulation) -> loosened tolerance.
  np.testing.assert_allclose(np.asarray(out), np.asarray(ref),
                             rtol=2e-2, atol=2e-2)
  assert out.shape == (N, Cout, 2 * H, 2 * W) and out.dtype == jnp.float32
  print("KERNEL_OK")
</pallas_src>

<mosaic_0001>
module attributes {stable_mosaic.version = 11 : i64} {
  func.func @_deconv_prelu_kernel(%arg0: i32, %arg1: memref<1x4x256xf32, #tpu.memory_space<vmem>>, %arg2: memref<16x40xbf16, #tpu.memory_space<vmem>>, %arg3: memref<16x1xf32, #tpu.memory_space<vmem>>, %arg4: memref<1xf32, #tpu.memory_space<smem>>, %arg5: memref<1x16x256xf32, #tpu.memory_space<vmem>>, %arg6: memref<40x256xf32, #tpu.memory_space<vmem>>) attributes {dimension_semantics = [#tpu.dimension_semantics<parallel>], iteration_bounds = array<i64: 2>, scalar_prefetch = 0 : i64, scratch_operands = 1 : i64, tpu.core_type = #tpu.core_type<tc>, window_params = [{transform_indices = @transform_0, window_bounds = array<i64: 1, 4, 256>}, {pipeline_mode = #tpu.pipeline_mode<synchronous>, transform_indices = @transform_1, window_bounds = array<i64: 16, 40>}, {pipeline_mode = #tpu.pipeline_mode<synchronous>, transform_indices = @transform_2, window_bounds = array<i64: 16, 1>}, {transform_indices = @transform_3, window_bounds = array<i64: 1>}, {transform_indices = @transform_4, window_bounds = array<i64: 1, 16, 256>}]} {
    %cst = arith.constant 0.000000e+00 : f32
    %0 = vector.broadcast %cst : f32 to vector<40x256xf32>
    %c0 = arith.constant 0 : index
    %c0_0 = arith.constant 0 : index
    %1 = vector.load %arg6[%c0, %c0_0] : memref<40x256xf32, #tpu.memory_space<vmem>>, vector<40x256xf32>
    tpu.vector_store %arg6[%c0, %c0_0], %0 {strides = array<i32>} : memref<40x256xf32, #tpu.memory_space<vmem>>, vector<40x256xf32>,
    %c0_1 = arith.constant 0 : index
    %c0_2 = arith.constant 0 : index
    %c0_3 = arith.constant 0 : index
    %2 = vector.load %arg1[%c0_1, %c0_2, %c0_3] : memref<1x4x256xf32, #tpu.memory_space<vmem>>, vector<1x4x239xf32>
    %3 = vector.shape_cast %2 : vector<1x4x239xf32> to vector<4x239xf32>
    %4 = tpu.iota {dimensions = array<i32: 1>} : vector<4x239xi32>
    %c17_i32 = arith.constant 17 : i32
    %5 = vector.broadcast %c17_i32 : i32 to vector<4x239xi32>
    %6 = arith.addi %5, %4 : vector<4x239xi32>
    %c16_i32 = arith.constant 16 : i32
    %c0_i32 = arith.constant 0 : i32
    %7 = arith.cmpi eq, %c16_i32, %c0_i32 : i32
    %c1_i32 = arith.constant 1 : i32
    %8 = arith.select %7, %c1_i32, %c16_i32 : i32
    %9 = vector.broadcast %8 : i32 to vector<4x239xi32>
    %10 = arith.remsi %6, %9 : vector<4x239xi32>
    %c0_i32_4 = arith.constant 0 : i32
    %11 = vector.broadcast %c0_i32_4 : i32 to vector<4x239xi32>
    %12 = arith.cmpi ne, %10, %11 : vector<4x239xi32>
    %c0_i32_5 = arith.constant 0 : i32
    %13 = vector.broadcast %c0_i32_5 : i32 to vector<4x239xi32>
    %14 = arith.cmpi slt, %10, %13 : vector<4x239xi32>
    %c0_i32_6 = arith.constant 0 : i32
    %15 = arith.cmpi slt, %8, %c0_i32_6 : i32
    %16 = vector.broadcast %15 : i1 to vector<4x239xi1>
    %17 = vector.broadcast %16 : vector<4x239xi1> to vector<4x239xi1>
    %18 = arith.xori %14, %17 : vector<4x239xi1>
    %19 = arith.andi %18, %12 : vector<4x239xi1>
    %20 = vector.broadcast %8 : i32 to vector<4x239xi32>
    %21 = arith.addi %10, %20 : vector<4x239xi32>
    %22 = arith.select %19, %21, %10 : vector<4x239xi1>, vector<4x239xi32>
    %c-1_i32 = arith.constant -1 : i32
    %23 = vector.broadcast %c-1_i32 : i32 to vector<4x239xi32>
    %24 = arith.addi %22, %23 : vector<4x239xi32>
    %c0_i32_7 = arith.constant 0 : i32
    %25 = vector.broadcast %c0_i32_7 : i32 to vector<4x239xi32>
    %26 = arith.cmpi sge, %24, %25 : vector<4x239xi32>
    %c-1_i32_8 = arith.constant -1 : i32
    %27 = vector.broadcast %c-1_i32_8 : i32 to vector<4x239xi32>
    %28 = arith.addi %22, %27 : vector<4x239xi32>
    %c16_i32_9 = arith.constant 16 : i32
    %29 = vector.broadcast %c16_i32_9 : i32 to vector<4x239xi32>
    %30 = arith.cmpi slt, %28, %29 : vector<4x239xi32>
    %31 = arith.andi %26, %30 : vector<4x239xi1>
    %cst_10 = arith.constant 0.000000e+00 : f32
    %32 = vector.broadcast %cst_10 : f32 to vector<4x239xf32>
    %33 = arith.select %31, %3, %32 : vector<4x239xi1>, vector<4x239xf32>
    %c0_11 = arith.constant 0 : index
    %c17 = arith.constant 17 : index
    %34 = vector.load %arg6[%c0_11, %c17] : memref<40x256xf32, #tpu.memory_space<vmem>>, vector<4x239xf32>
    tpu.vector_store %arg6[%c0_11, %c17], %33 {strides = array<i32>} : memref<40x256xf32, #tpu.memory_space<vmem>>, vector<4x239xf32>,
    %c0_12 = arith.constant 0 : index
    %c0_13 = arith.constant 0 : index
    %c0_14 = arith.constant 0 : index
    %35 = vector.load %arg1[%c0_12, %c0_13, %c0_14] : memref<1x4x256xf32, #tpu.memory_space<vmem>>, vector<1x4x240xf32>
    %36 = vector.shape_cast %35 : vector<1x4x240xf32> to vector<4x240xf32>
    %c4 = arith.constant 4 : index
    %c16 = arith.constant 16 : index
    %37 = vector.load %arg6[%c4, %c16] : memref<40x256xf32, #tpu.memory_space<vmem>>, vector<4x240xf32>
    tpu.vector_store %arg6[%c4, %c16], %36 {strides = array<i32>} : memref<40x256xf32, #tpu.memory_space<vmem>>, vector<4x240xf32>,
    %c0_15 = arith.constant 0 : index
    %c0_16 = arith.constant 0 : index
    %c0_17 = arith.constant 0 : index
    %38 = vector.load %arg1[%c0_15, %c0_16, %c0_17] : memref<1x4x256xf32, #tpu.memory_space<vmem>>, vector<1x4x241xf32>
    %39 = vector.shape_cast %38 : vector<1x4x241xf32> to vector<4x241xf32>
    %40 = tpu.iota {dimensions = array<i32: 1>} : vector<4x241xi32>
    %c15_i32 = arith.constant 15 : i32
    %41 = vector.broadcast %c15_i32 : i32 to vector<4x241xi32>
    %42 = arith.addi %41, %40 : vector<4x241xi32>
    %c16_i32_18 = arith.constant 16 : i32
    %c0_i32_19 = arith.constant 0 : i32
    %43 = arith.cmpi eq, %c16_i32_18, %c0_i32_19 : i32
    %c1_i32_20 = arith.constant 1 : i32
    %44 = arith.select %43, %c1_i32_20, %c16_i32_18 : i32
    %45 = vector.broadcast %44 : i32 to vector<4x241xi32>
    %46 = arith.remsi %42, %45 : vector<4x241xi32>
    %c0_i32_21 = arith.constant 0 : i32
    %47 = vector.broadcast %c0_i32_21 : i32 to vector<4x241xi32>
    %48 = arith.cmpi ne, %46, %47 : vector<4x241xi32>
    %c0_i32_22 = arith.constant 0 : i32
    %49 = vector.broadcast %c0_i32_22 : i32 to vector<4x241xi32>
    %50 = arith.cmpi slt, %46, %49 : vector<4x241xi32>
    %c0_i32_23 = arith.constant 0 : i32
    %51 = arith.cmpi slt, %44, %c0_i32_23 : i32
    %52 = vector.broadcast %51 : i1 to vector<4x241xi1>
    %53 = vector.broadcast %52 : vector<4x241xi1> to vector<4x241xi1>
    %54 = arith.xori %50, %53 : vector<4x241xi1>
    %55 = arith.andi %54, %48 : vector<4x241xi1>
    %56 = vector.broadcast %44 : i32 to vector<4x241xi32>
    %57 = arith.addi %46, %56 : vector<4x241xi32>
    %58 = arith.select %55, %57, %46 : vector<4x241xi1>, vector<4x241xi32>
    %c1_i32_24 = arith.constant 1 : i32
    %59 = vector.broadcast %c1_i32_24 : i32 to vector<4x241xi32>
    %60 = arith.addi %58, %59 : vector<4x241xi32>
    %c0_i32_25 = arith.constant 0 : i32
    %61 = vector.broadcast %c0_i32_25 : i32 to vector<4x241xi32>
    %62 = arith.cmpi sge, %60, %61 : vector<4x241xi32>
    %c1_i32_26 = arith.constant 1 : i32
    %63 = vector.broadcast %c1_i32_26 : i32 to vector<4x241xi32>
    %64 = arith.addi %58, %63 : vector<4x241xi32>
    %c16_i32_27 = arith.constant 16 : i32
    %65 = vector.broadcast %c16_i32_27 : i32 to vector<4x241xi32>
    %66 = arith.cmpi slt, %64, %65 : vector<4x241xi32>
    %67 = arith.andi %62, %66 : vector<4x241xi1>
    %cst_28 = arith.constant 0.000000e+00 : f32
    %68 = vector.broadcast %cst_28 : f32 to vector<4x241xf32>
    %69 = arith.select %67, %39, %68 : vector<4x241xi1>, vector<4x241xf32>
    %c8 = arith.constant 8 : index
    %c15 = arith.constant 15 : index
    %70 = vector.load %arg6[%c8, %c15] : memref<40x256xf32, #tpu.memory_space<vmem>>, vector<4x241xf32>
    tpu.vector_store %arg6[%c8, %c15], %69 {strides = array<i32>} : memref<40x256xf32, #tpu.memory_space<vmem>>, vector<4x241xf32>,
    %c0_29 = arith.constant 0 : index
    %c0_30 = arith.constant 0 : index
    %c0_31 = arith.constant 0 : index
    %71 = vector.load %arg1[%c0_29, %c0_30, %c0_31] : memref<1x4x256xf32, #tpu.memory_space<vmem>>, vector<1x4x255xf32>
    %72 = vector.shape_cast %71 : vector<1x4x255xf32> to vector<4x255xf32>
    %73 = tpu.iota {dimensions = array<i32: 1>} : vector<4x255xi32>
    %c1_i32_32 = arith.constant 1 : i32
    %74 = vector.broadcast %c1_i32_32 : i32 to vector<4x255xi32>
    %75 = arith.addi %74, %73 : vector<4x255xi32>
    %c16_i32_33 = arith.constant 16 : i32
    %c0_i32_34 = arith.constant 0 : i32
    %76 = arith.cmpi eq, %c16_i32_33, %c0_i32_34 : i32
    %c1_i32_35 = arith.constant 1 : i32
    %77 = arith.select %76, %c1_i32_35, %c16_i32_33 : i32
    %78 = vector.broadcast %77 : i32 to vector<4x255xi32>
    %79 = arith.remsi %75, %78 : vector<4x255xi32>
    %c0_i32_36 = arith.constant 0 : i32
    %80 = vector.broadcast %c0_i32_36 : i32 to vector<4x255xi32>
    %81 = arith.cmpi ne, %79, %80 : vector<4x255xi32>
    %c0_i32_37 = arith.constant 0 : i32
    %82 = vector.broadcast %c0_i32_37 : i32 to vector<4x255xi32>
    %83 = arith.cmpi slt, %79, %82 : vector<4x255xi32>
    %c0_i32_38 = arith.constant 0 : i32
    %84 = arith.cmpi slt, %77, %c0_i32_38 : i32
    %85 = vector.broadcast %84 : i1 to vector<4x255xi1>
    %86 = vector.broadcast %85 : vector<4x255xi1> to vector<4x255xi1>
    %87 = arith.xori %83, %86 : vector<4x255xi1>
    %88 = arith.andi %87, %81 : vector<4x255xi1>
    %89 = vector.broadcast %77 : i32 to vector<4x255xi32>
    %90 = arith.addi %79, %89 : vector<4x255xi32>
    %91 = arith.select %88, %90, %79 : vector<4x255xi1>, vector<4x255xi32>
    %c-1_i32_39 = arith.constant -1 : i32
    %92 = vector.broadcast %c-1_i32_39 : i32 to vector<4x255xi32>
    %93 = arith.addi %91, %92 : vector<4x255xi32>
    %c0_i32_40 = arith.constant 0 : i32
    %94 = vector.broadcast %c0_i32_40 : i32 to vector<4x255xi32>
    %95 = arith.cmpi sge, %93, %94 : vector<4x255xi32>
    %c-1_i32_41 = arith.constant -1 : i32
    %96 = vector.broadcast %c-1_i32_41 : i32 to vector<4x255xi32>
    %97 = arith.addi %91, %96 : vector<4x255xi32>
    %c16_i32_42 = arith.constant 16 : i32
    %98 = vector.broadcast %c16_i32_42 : i32 to vector<4x255xi32>
    %99 = arith.cmpi slt, %97, %98 : vector<4x255xi32>
    %100 = arith.andi %95, %99 : vector<4x255xi1>
    %cst_43 = arith.constant 0.000000e+00 : f32
    %101 = vector.broadcast %cst_43 : f32 to vector<4x255xf32>
    %102 = arith.select %100, %72, %101 : vector<4x255xi1>, vector<4x255xf32>
    %c12 = arith.constant 12 : index
    %c1 = arith.constant 1 : index
    %103 = vector.load %arg6[%c12, %c1] : memref<40x256xf32, #tpu.memory_space<vmem>>, vector<4x255xf32>
    tpu.vector_store %arg6[%c12, %c1], %102 {strides = array<i32>} : memref<40x256xf32, #tpu.memory_space<vmem>>, vector<4x255xf32>,
    %c0_44 = arith.constant 0 : index
    %c0_45 = arith.constant 0 : index
    %c0_46 = arith.constant 0 : index
    %104 = vector.load %arg1[%c0_44, %c0_45, %c0_46] : memref<1x4x256xf32, #tpu.memory_space<vmem>>, vector<1x4x256xf32>
    %105 = vector.shape_cast %104 : vector<1x4x256xf32> to vector<4x256xf32>
    %c16_47 = arith.constant 16 : index
    %c0_48 = arith.constant 0 : index
    %106 = vector.load %arg6[%c16_47, %c0_48] : memref<40x256xf32, #tpu.memory_space<vmem>>, vector<4x256xf32>
    tpu.vector_store %arg6[%c16_47, %c0_48], %105 {strides = array<i32>} : memref<40x256xf32, #tpu.memory_space<vmem>>, vector<4x256xf32>,
    %c0_49 = arith.constant 0 : index
    %c0_50 = arith.constant 0 : index
    %c1_51 = arith.constant 1 : index
    %107 = vector.load %arg1[%c0_49, %c0_50, %c1_51] : memref<1x4x256xf32, #tpu.memory_space<vmem>>, vector<1x4x255xf32>
    %108 = vector.shape_cast %107 : vector<1x4x255xf32> to vector<4x255xf32>
    %109 = tpu.iota {dimensions = array<i32: 1>} : vector<4x255xi32>
    %c0_i32_52 = arith.constant 0 : i32
    %110 = vector.broadcast %c0_i32_52 : i32 to vector<4x255xi32>
    %111 = arith.addi %110, %109 : vector<4x255xi32>
    %c16_i32_53 = arith.constant 16 : i32
    %c0_i32_54 = arith.constant 0 : i32
    %112 = arith.cmpi eq, %c16_i32_53, %c0_i32_54 : i32
    %c1_i32_55 = arith.constant 1 : i32
    %113 = arith.select %112, %c1_i32_55, %c16_i32_53 : i32
    %114 = vector.broadcast %113 : i32 to vector<4x255xi32>
    %115 = arith.remsi %111, %114 : vector<4x255xi32>
    %c0_i32_56 = arith.constant 0 : i32
    %116 = vector.broadcast %c0_i32_56 : i32 to vector<4x255xi32>
    %117 = arith.cmpi ne, %115, %116 : vector<4x255xi32>
    %c0_i32_57 = arith.constant 0 : i32
    %118 = vector.broadcast %c0_i32_57 : i32 to vector<4x255xi32>
    %119 = arith.cmpi slt, %115, %118 : vector<4x255xi32>
    %c0_i32_58 = arith.constant 0 : i32
    %120 = arith.cmpi slt, %113, %c0_i32_58 : i32
    %121 = vector.broadcast %120 : i1 to vector<4x255xi1>
    %122 = vector.broadcast %121 : vector<4x255xi1> to vector<4x255xi1>
    %123 = arith.xori %119, %122 : vector<4x255xi1>
    %124 = arith.andi %123, %117 : vector<4x255xi1>
    %125 = vector.broadcast %113 : i32 to vector<4x255xi32>
    %126 = arith.addi %115, %125 : vector<4x255xi32>
    %127 = arith.select %124, %126, %115 : vector<4x255xi1>, vector<4x255xi32>
    %c1_i32_59 = arith.constant 1 : i32
    %128 = vector.broadcast %c1_i32_59 : i32 to vector<4x255xi32>
    %129 = arith.addi %127, %128 : vector<4x255xi32>
    %c0_i32_60 = arith.constant 0 : i32
    %130 = vector.broadcast %c0_i32_60 : i32 to vector<4x255xi32>
    %131 = arith.cmpi sge, %129, %130 : vector<4x255xi32>
    %c1_i32_61 = arith.constant 1 : i32
    %132 = vector.broadcast %c1_i32_61 : i32 to vector<4x255xi32>
    %133 = arith.addi %127, %132 : vector<4x255xi32>
    %c16_i32_62 = arith.constant 16 : i32
    %134 = vector.broadcast %c16_i32_62 : i32 to vector<4x255xi32>
    %135 = arith.cmpi slt, %133, %134 : vector<4x255xi32>
    %136 = arith.andi %131, %135 : vector<4x255xi1>
    %cst_63 = arith.constant 0.000000e+00 : f32
    %137 = vector.broadcast %cst_63 : f32 to vector<4x255xf32>
    %138 = arith.select %136, %108, %137 : vector<4x255xi1>, vector<4x255xf32>
    %c20 = arith.constant 20 : index
    %c0_64 = arith.constant 0 : index
    %139 = vector.load %arg6[%c20, %c0_64] : memref<40x256xf32, #tpu.memory_space<vmem>>, vector<4x255xf32>
    tpu.vector_store %arg6[%c20, %c0_64], %138 {strides = array<i32>} : memref<40x256xf32, #tpu.memory_space<vmem>>, vector<4x255xf32>,
    %c0_65 = arith.constant 0 : index
    %c0_66 = arith.constant 0 : index
    %c15_67 = arith.constant 15 : index
    %140 = vector.load %arg1[%c0_65, %c0_66, %c15_67] : memref<1x4x256xf32, #tpu.memory_space<vmem>>, vector<1x4x241xf32>
    %141 = vector.shape_cast %140 : vector<1x4x241xf32> to vector<4x241xf32>
    %142 = tpu.iota {dimensions = array<i32: 1>} : vector<4x241xi32>
    %c0_i32_68 = arith.constant 0 : i32
    %143 = vector.broadcast %c0_i32_68 : i32 to vector<4x241xi32>
    %144 = arith.addi %143, %142 : vector<4x241xi32>
    %c16_i32_69 = arith.constant 16 : i32
    %c0_i32_70 = arith.constant 0 : i32
    %145 = arith.cmpi eq, %c16_i32_69, %c0_i32_70 : i32
    %c1_i32_71 = arith.constant 1 : i32
    %146 = arith.select %145, %c1_i32_71, %c16_i32_69 : i32
    %147 = vector.broadcast %146 : i32 to vector<4x241xi32>
    %148 = arith.remsi %144, %147 : vector<4x241xi32>
    %c0_i32_72 = arith.constant 0 : i32
    %149 = vector.broadcast %c0_i32_72 : i32 to vector<4x241xi32>
    %150 = arith.cmpi ne, %148, %149 : vector<4x241xi32>
    %c0_i32_73 = arith.constant 0 : i32
    %151 = vector.broadcast %c0_i32_73 : i32 to vector<4x241xi32>
    %152 = arith.cmpi slt, %148, %151 : vector<4x241xi32>
    %c0_i32_74 = arith.constant 0 : i32
    %153 = arith.cmpi slt, %146, %c0_i32_74 : i32
    %154 = vector.broadcast %153 : i1 to vector<4x241xi1>
    %155 = vector.broadcast %154 : vector<4x241xi1> to vector<4x241xi1>
    %156 = arith.xori %152, %155 : vector<4x241xi1>
    %157 = arith.andi %156, %150 : vector<4x241xi1>
    %158 = vector.broadcast %146 : i32 to vector<4x241xi32>
    %159 = arith.addi %148, %158 : vector<4x241xi32>
    %160 = arith.select %157, %159, %148 : vector<4x241xi1>, vector<4x241xi32>
    %c-1_i32_75 = arith.constant -1 : i32
    %161 = vector.broadcast %c-1_i32_75 : i32 to vector<4x241xi32>
    %162 = arith.addi %160, %161 : vector<4x241xi32>
    %c0_i32_76 = arith.constant 0 : i32
    %163 = vector.broadcast %c0_i32_76 : i32 to vector<4x241xi32>
    %164 = arith.cmpi sge, %162, %163 : vector<4x241xi32>
    %c-1_i32_77 = arith.constant -1 : i32
    %165 = vector.broadcast %c-1_i32_77 : i32 to vector<4x241xi32>
    %166 = arith.addi %160, %165 : vector<4x241xi32>
    %c16_i32_78 = arith.constant 16 : i32
    %167 = vector.broadcast %c16_i32_78 : i32 to vector<4x241xi32>
    %168 = arith.cmpi slt, %166, %167 : vector<4x241xi32>
    %169 = arith.andi %164, %168 : vector<4x241xi1>
    %cst_79 = arith.constant 0.000000e+00 : f32
    %170 = vector.broadcast %cst_79 : f32 to vector<4x241xf32>
    %171 = arith.select %169, %141, %170 : vector<4x241xi1>, vector<4x241xf32>
    %c24 = arith.constant 24 : index
    %c0_80 = arith.constant 0 : index
    %172 = vector.load %arg6[%c24, %c0_80] : memref<40x256xf32, #tpu.memory_space<vmem>>, vector<4x241xf32>
    tpu.vector_store %arg6[%c24, %c0_80], %171 {strides = array<i32>} : memref<40x256xf32, #tpu.memory_space<vmem>>, vector<4x241xf32>,
    %c0_81 = arith.constant 0 : index
    %c0_82 = arith.constant 0 : index
    %c16_83 = arith.constant 16 : index
    %173 = vector.load %arg1[%c0_81, %c0_82, %c16_83] : memref<1x4x256xf32, #tpu.memory_space<vmem>>, vector<1x4x240xf32>
    %174 = vector.shape_cast %173 : vector<1x4x240xf32> to vector<4x240xf32>
    %c28 = arith.constant 28 : index
    %c0_84 = arith.constant 0 : index
    %175 = vector.load %arg6[%c28, %c0_84] : memref<40x256xf32, #tpu.memory_space<vmem>>, vector<4x240xf32>
    tpu.vector_store %arg6[%c28, %c0_84], %174 {strides = array<i32>} : memref<40x256xf32, #tpu.memory_space<vmem>>, vector<4x240xf32>,
    %c0_85 = arith.constant 0 : index
    %c0_86 = arith.constant 0 : index
    %c17_87 = arith.constant 17 : index
    %176 = vector.load %arg1[%c0_85, %c0_86, %c17_87] : memref<1x4x256xf32, #tpu.memory_space<vmem>>, vector<1x4x239xf32>
    %177 = vector.shape_cast %176 : vector<1x4x239xf32> to vector<4x239xf32>
    %178 = tpu.iota {dimensions = array<i32: 1>} : vector<4x239xi32>
    %c0_i32_88 = arith.constant 0 : i32
    %179 = vector.broadcast %c0_i32_88 : i32 to vector<4x239xi32>
    %180 = arith.addi %179, %178 : vector<4x239xi32>
    %c16_i32_89 = arith.constant 16 : i32
    %c0_i32_90 = arith.constant 0 : i32
    %181 = arith.cmpi eq, %c16_i32_89, %c0_i32_90 : i32
    %c1_i32_91 = arith.constant 1 : i32
    %182 = arith.select %181, %c1_i32_91, %c16_i32_89 : i32
    %183 = vector.broadcast %182 : i32 to vector<4x239xi32>
    %184 = arith.remsi %180, %183 : vector<4x239xi32>
    %c0_i32_92 = arith.constant 0 : i32
    %185 = vector.broadcast %c0_i32_92 : i32 to vector<4x239xi32>
    %186 = arith.cmpi ne, %184, %185 : vector<4x239xi32>
    %c0_i32_93 = arith.constant 0 : i32
    %187 = vector.broadcast %c0_i32_93 : i32 to vector<4x239xi32>
    %188 = arith.cmpi slt, %184, %187 : vector<4x239xi32>
    %c0_i32_94 = arith.constant 0 : i32
    %189 = arith.cmpi slt, %182, %c0_i32_94 : i32
    %190 = vector.broadcast %189 : i1 to vector<4x239xi1>
    %191 = vector.broadcast %190 : vector<4x239xi1> to vector<4x239xi1>
    %192 = arith.xori %188, %191 : vector<4x239xi1>
    %193 = arith.andi %192, %186 : vector<4x239xi1>
    %194 = vector.broadcast %182 : i32 to vector<4x239xi32>
    %195 = arith.addi %184, %194 : vector<4x239xi32>
    %196 = arith.select %193, %195, %184 : vector<4x239xi1>, vector<4x239xi32>
    %c1_i32_95 = arith.constant 1 : i32
    %197 = vector.broadcast %c1_i32_95 : i32 to vector<4x239xi32>
    %198 = arith.addi %196, %197 : vector<4x239xi32>
    %c0_i32_96 = arith.constant 0 : i32
    %199 = vector.broadcast %c0_i32_96 : i32 to vector<4x239xi32>
    %200 = arith.cmpi sge, %198, %199 : vector<4x239xi32>
    %c1_i32_97 = arith.constant 1 : i32
    %201 = vector.broadcast %c1_i32_97 : i32 to vector<4x239xi32>
    %202 = arith.addi %196, %201 : vector<4x239xi32>
    %c16_i32_98 = arith.constant 16 : i32
    %203 = vector.broadcast %c16_i32_98 : i32 to vector<4x239xi32>
    %204 = arith.cmpi slt, %202, %203 : vector<4x239xi32>
    %205 = arith.andi %200, %204 : vector<4x239xi1>
    %cst_99 = arith.constant 0.000000e+00 : f32
    %206 = vector.broadcast %cst_99 : f32 to vector<4x239xf32>
    %207 = arith.select %205, %177, %206 : vector<4x239xi1>, vector<4x239xf32>
    %c32 = arith.constant 32 : index
    %c0_100 = arith.constant 0 : index
    %208 = vector.load %arg6[%c32, %c0_100] : memref<40x256xf32, #tpu.memory_space<vmem>>, vector<4x239xf32>
    tpu.vector_store %arg6[%c32, %c0_100], %207 {strides = array<i32>} : memref<40x256xf32, #tpu.memory_space<vmem>>, vector<4x239xf32>,
    %c0_101 = arith.constant 0 : index
    %c0_102 = arith.constant 0 : index
    %209 = vector.load %arg6[%c0_101, %c0_102] : memref<40x256xf32, #tpu.memory_space<vmem>>, vector<40x256xf32>
    %210 = arith.truncf %209 : vector<40x256xf32> to vector<40x256xbf16>
    %c0_103 = arith.constant 0 : index
    %c0_104 = arith.constant 0 : index
    %211 = vector.load %arg2[%c0_103, %c0_104] : memref<16x40xbf16, #tpu.memory_space<vmem>>, vector<16x40xbf16>
    %cst_105 = arith.constant dense<0.000000e+00> : vector<16x256xf32>
    %212 = tpu.matmul %211, %210, %cst_105 {dimension_numbers = #tpu.dot_dimension_numbers<[1], [0], [0], [1], [0, 0, 1, 1], [], []>} : vector<16x40xbf16>, vector<40x256xbf16>, vector<16x256xf32> -> vector<16x256xf32>
    %c0_106 = arith.constant 0 : index
    %c0_107 = arith.constant 0 : index
    %213 = vector.load %arg3[%c0_106, %c0_107] : memref<16x1xf32, #tpu.memory_space<vmem>>, vector<16x1xf32>
    %214 = vector.broadcast %213 : vector<16x1xf32> to vector<16x256xf32>
    %215 = arith.addf %212, %214 : vector<16x256xf32>
    %c0_108 = arith.constant 0 : index
    %216 = memref.load %arg4[%c0_108] : memref<1xf32, #tpu.memory_space<smem>>
    %cst_109 = arith.constant 0.000000e+00 : f32
    %217 = vector.broadcast %cst_109 : f32 to vector<16x256xf32>
    %218 = arith.cmpf oge, %215, %217 : vector<16x256xf32>
    %219 = vector.broadcast %216 : f32 to vector<16x256xf32>
    %220 = arith.mulf %219, %215 : vector<16x256xf32>
    %221 = arith.select %218, %215, %220 : vector<16x256xi1>, vector<16x256xf32>
    %c0_110 = arith.constant 0 : index
    %c0_111 = arith.constant 0 : index
    %c0_112 = arith.constant 0 : index
    %222 = vector.load %arg5[%c0_110, %c0_111, %c0_112] : memref<1x16x256xf32, #tpu.memory_space<vmem>>, vector<1x16x256xf32>
    %223 = vector.shape_cast %222 : vector<1x16x256xf32> to vector<16x256xf32>
    %224 = vector.shape_cast %221 : vector<16x256xf32> to vector<1x16x256xf32>
    tpu.vector_store %arg5[%c0_110, %c0_111, %c0_112], %224 {strides = array<i32>} : memref<1x16x256xf32, #tpu.memory_space<vmem>>, vector<1x16x256xf32>,
    return
  }
  func.func @transform_0(%arg0: i32) -> (i32, i32, i32) {
    %c0_i32 = arith.constant 0 : i32
    %c0_i32_0 = arith.constant 0 : i32
    %c0_i32_1 = arith.constant 0 : i32
    return %arg0, %c0_i32, %c0_i32_0 : i32, i32, i32
  }
  func.func @transform_1(%arg0: i32) -> (i32, i32) {
    %c0_i32 = arith.constant 0 : i32
    %c0_i32_0 = arith.constant 0 : i32
    %c0_i32_1 = arith.constant 0 : i32
    return %c0_i32, %c0_i32_0 : i32, i32
  }
  func.func @transform_2(%arg0: i32) -> (i32, i32) {
    %c0_i32 = arith.constant 0 : i32
    %c0_i32_0 = arith.constant 0 : i32
    %c0_i32_1 = arith.constant 0 : i32
    return %c0_i32, %c0_i32_0 : i32, i32
  }
  func.func @transform_3(%arg0: i32) -> i32 {
    %c0_i32 = arith.constant 0 : i32
    %c0_i32_0 = arith.constant 0 : i32
    return %c0_i32 : i32
  }
  func.func @transform_4(%arg0: i32) -> (i32, i32, i32) {
    %c0_i32 = arith.constant 0 : i32
    %c0_i32_0 = arith.constant 0 : i32
    %c0_i32_1 = arith.constant 0 : i32
    return %arg0, %c0_i32, %c0_i32_0 : i32, i32, i32
  }
}

</mosaic_0001>

<llo_original>
// kernel: tile.8
$region0: #{tile.8}
  #allocation0 [shape = 's32[1]{0}', space=sflag, size = 0x4, scoped, tag = 'scoped memory for tile.8']
  %s0 = inlined_call_operand.vmem [shape: f32[4], index: 0, kind: input, shape index: {}]
  %s1 = inlined_call_operand.vmem [shape: f32[4,4], index: 1, kind: output, shape index: {}]
  // Predicated region
  $region2: #{tile.8} parent=0 // pred_check
    _
  $region3: #{tile.8} parent=0 // pred_check_branch
    %3 = sbr.rel (0) target = $region5
  $region4: #{tile.8} parent=0 // pred_region
    _
  $region5: #{tile.8} parent=0 // pred_fallthru
    _
  %v4 = vld [vmem:[%s0] ss:$0 sm:$0xff]
  %5 = vst [vmem:[%s1] sm:$0xf] %v4

// kernel: tile.0
$region0: #{tile.0}
  %s0 = inlined_call_operand.vmem [shape: f32[4,4], index: 0, kind: input, shape index: {}]
  %s1 = inlined_call_operand.vmem [shape: f32[16,1], index: 1, kind: output, shape index: {}]
  $region1: #{tile.0} parent=0
    #allocation0 [shape = 'u8[4096]{0}', space=vmem, size = 0x1000, scoped, tag = 'scoped mem for input reshape']
    %s3 = sshllo.u32 0, 4
    %v4 = vld [vmem:[%s0] sm:%s3]
    %5 = vst [vmem:[#allocation0] sm:%s3] %v4
    %v6 = vld [vmem:[#allocation0] sm:$0xf]
    %vm7 = vcmask 7168
    %8 = vst.msk [vmem:[%s1] ss:$4 sm:$0xf] %vm7, %v6
    %v9 = vld [vmem:[#allocation0] sm:$0xf]
    %10 = vrot.lane.b32.xlu0 %v9, 127
    %v11 = vpop.permute.xlu0 %10
    %vm12 = vcmask 7168
    %s13 = scalar_lea.vmem %s1, 1
    %14 = vst.msk [vmem:[%s13] ss:$4 sm:$0xf] %vm12, %v11
    %v15 = vld [vmem:[#allocation0] sm:$0xf]
    %16 = vrot.lane.b32.xlu0 %v15, 126
    %v17 = vpop.permute.xlu0 %16
    %vm18 = vcmask 7168
    %s19 = scalar_lea.vmem %s1, 2
    %20 = vst.msk [vmem:[%s19] ss:$4 sm:$0xf] %vm18, %v17
    %v21 = vld [vmem:[#allocation0] sm:$0xf]
    %22 = vrot.lane.b32.xlu0 %v21, 125
    %v23 = vpop.permute.xlu0 %22
    %vm24 = vcmask 7168
    %s25 = scalar_lea.vmem %s1, 3
    %26 = vst.msk [vmem:[%s25] ss:$4 sm:$0xf] %vm24, %v23

// kernel: deconv_block_pallas.1
$region0: #{deconv_block_pallas.1}
  #allocation0 [shape = 'u32[]', space=smem, size = 0x4, offset = 0x4, fixed_abs, tag = 'smem constant byte address 0x4 - core index']
  #allocation1 [shape = 'u32[144,128]{1,0:T(1,128)}', space=vmem, size = 0x12000, scoped, tag = 'internal scratch']
  #allocation2 [shape = 'f32[40,256]{1,0:T(8,128)}', space=vmem, size = 0xa000, scoped, tag = 'scratch operand']
  #allocation3 [shape = 'f32[1]{0:T(128)S(6)}', space=smem, size = 0x200, scoped, tag = 'scoped memory for deconv_block_pallas.1']
  %s0 = inlined_call_operand.vmem [shape: f32[2,4,256], index: 0, kind: input, shape index: {}]
  %s1 = inlined_call_operand.vmem [shape: bf16[16,40], index: 1, kind: input, shape index: {}]
  %s2 = inlined_call_operand.vmem [shape: f32[16,1], index: 2, kind: input, shape index: {}]
  %s3 = inlined_call_operand.<no memory space> [shape: f32[1], index: 3, kind: input, shape index: {}]
  %s4 = inlined_call_operand.vmem [shape: f32[2,16,256], index: 4, kind: output, shape index: {}]
  %s5 = sld [smem:[#allocation0]]
  $region49: #{deconv_block_pallas.1} parent=0
    _
  %s7 = ssub.s32 1, %s5
  %s8 = scalar_select 0, %s7, %s5
  %9 = sst [smem:[#allocation3]] %s3
  loop: start=0, step=1, limit=4
  $region2: #{deconv_block_pallas.1} parent=0 // loop_pre_header
    _
  $region3: #{deconv_block_pallas.1} parent=0 // loop_header
    %s11 = sphi 0, %s15
    %p12 = scmp.ge.s32.totalorder %s11, 4
    %s21 = sphi 0, %s23
    %s24 = sphi 0, %s21
    %s25 = sphi 0, %s24
    %s41 = sphi 0, %s25
    %s45 = sphi 0, %s45
    %s47 = sphi 0, %s45
    %s48 = sphi 0, %s47
    %s62 = sphi 0, %s48
    %s66 = sphi 0, %s66
    %s68 = sphi 0, %s66
    %s69 = sphi 0, %s68
    %s83 = sphi 0, %s69
    %s87 = sphi 0, %s87
    %s89 = sphi 0, %s87
    %s90 = sphi 0, %s89
    %s104 = sphi 0, %s90
    %s110 = sphi 0, %s112
    %s113 = sphi 0, %s110
    %s114 = sphi 0, %s113
    %s130 = sphi 0, %s114
  $region4: #{deconv_block_pallas.1} parent=0 // loop_header_branch
    %14 = sbr.rel (%p12) target = $region8
  $region5: #{deconv_block_pallas.1} parent=0 // loop_body
    %s16 = ssub.s32 %s11, 1
    %s17 = ssub.s32 %s11, 2
    %s18 = sadd.s32 %s11, 1
    %s19 = ssub.s32 %s11, %s18
    %p20 = scmp.eq.s32.totalorder %s19, 0
    %s22 = sadd.s32 %s21, 1
    %s23 = scalar_select %p20, %s21, %s22
    %p26 = pneg %p20
    %p27 = scmp.eq.s32.totalorder %s11, 1
    %p28 = por %p26, %p27
    %p29 = scmp.ne.s32.totalorder %s21, %s24
    %p30 = scmp.eq.s32.totalorder %s11, 0
    %p31 = por %p29, %p30
    %p32 = scmp.ne.s32.totalorder %s21, %s24
    %p33 = scmp.eq.s32.totalorder %s16, 1
    %p34 = por %p32, %p33
    %p35 = scmp.ne.s32.totalorder %s24, %s25
    %p36 = scmp.eq.s32.totalorder %s16, 0
    %p37 = por %p35, %p36
    %p38 = scmp.ne.s32.totalorder %s24, %s25
    %p39 = scmp.eq.s32.totalorder %s17, 1
    %p40 = por %p38, %p39
    %p42 = scmp.ne.s32.totalorder %s25, %s41
    %p43 = scmp.eq.s32.totalorder %s17, 0
    %p44 = por %p42, %p43
    %s46 = sadd.s32 %s45, 1
    %p49 = scmp.eq.s32.totalorder %s11, 1
    %p50 = scmp.ne.s32.totalorder %s45, %s47
    %p51 = scmp.eq.s32.totalorder %s11, 0
    %p52 = por %p50, %p51
    %p53 = scmp.ne.s32.totalorder %s45, %s47
    %p54 = scmp.eq.s32.totalorder %s16, 1
    %p55 = por %p53, %p54
    %p56 = scmp.ne.s32.totalorder %s47, %s48
    %p57 = scmp.eq.s32.totalorder %s16, 0
    %p58 = por %p56, %p57
    %p59 = scmp.ne.s32.totalorder %s47, %s48
    %p60 = scmp.eq.s32.totalorder %s17, 1
    %p61 = por %p59, %p60
    %p63 = scmp.ne.s32.totalorder %s48, %s62
    %p64 = scmp.eq.s32.totalorder %s17, 0
    %p65 = por %p63, %p64
    %s67 = sadd.s32 %s66, 1
    %p70 = scmp.eq.s32.totalorder %s11, 1
    %p71 = scmp.ne.s32.totalorder %s66, %s68
    %p72 = scmp.eq.s32.totalorder %s11, 0
    %p73 = por %p71, %p72
    %p74 = scmp.ne.s32.totalorder %s66, %s68
    %p75 = scmp.eq.s32.totalorder %s16, 1
    %p76 = por %p74, %p75
    %p77 = scmp.ne.s32.totalorder %s68, %s69
    %p78 = scmp.eq.s32.totalorder %s16, 0
    %p79 = por %p77, %p78
    %p80 = scmp.ne.s32.totalorder %s68, %s69
    %p81 = scmp.eq.s32.totalorder %s17, 1
    %p82 = por %p80, %p81
    %p84 = scmp.ne.s32.totalorder %s69, %s83
    %p85 = scmp.eq.s32.totalorder %s17, 0
    %p86 = por %p84, %p85
    %s88 = sadd.s32 %s87, 1
    %p91 = scmp.eq.s32.totalorder %s11, 1
    %p92 = scmp.ne.s32.totalorder %s87, %s89
    %p93 = scmp.eq.s32.totalorder %s11, 0
    %p94 = por %p92, %p93
    %p95 = scmp.ne.s32.totalorder %s87, %s89
    %p96 = scmp.eq.s32.totalorder %s16, 1
    %p97 = por %p95, %p96
    %p98 = scmp.ne.s32.totalorder %s89, %s90
    %p99 = scmp.eq.s32.totalorder %s16, 0
    %p100 = por %p98, %p99
    %p101 = scmp.ne.s32.totalorder %s89, %s90
    %p102 = scmp.eq.s32.totalorder %s17, 1
    %p103 = por %p101, %p102
    %p105 = scmp.ne.s32.totalorder %s90, %s104
    %p106 = scmp.eq.s32.totalorder %s17, 0
    %p107 = por %p105, %p106
    %s108 = ssub.s32 %s11, %s18
    %p109 = scmp.eq.s32.totalorder %s108, 0
    %s111 = sadd.s32 %s110, 1
    %s112 = scalar_select %p109, %s110, %s111
    %p115 = pneg %p109
    %p116 = scmp.eq.s32.totalorder %s11, 1
    %p117 = por %p115, %p116
    %p118 = scmp.ne.s32.totalorder %s110, %s113
    %p119 = scmp.eq.s32.totalorder %s11, 0
    %p120 = por %p118, %p119
    %p121 = scmp.ne.s32.totalorder %s110, %s113
    %p122 = scmp.eq.s32.totalorder %s16, 1
    %p123 = por %p121, %p122
    %p124 = scmp.ne.s32.totalorder %s113, %s114
    %p125 = scmp.eq.s32.totalorder %s16, 0
    %p126 = por %p124, %p125
    %p127 = scmp.ne.s32.totalorder %s113, %s114
    %p128 = scmp.eq.s32.totalorder %s17, 1
    %p129 = por %p127, %p128
    %p131 = scmp.ne.s32.totalorder %s114, %s130
    %p132 = scmp.eq.s32.totalorder %s17, 0
    %p133 = por %p131, %p132
    %p134 = scmp.le.s32.totalorder 1, %s11
    %p135 = scmp.lt.s32.totalorder %s11, 3
    %p136 = pnand %p134, %p135
    %p137 = pneg %p136
    // Predicated region
    $region9: #{deconv_block_pallas.1} parent=5 // pred_check
      _
    $region10: #{deconv_block_pallas.1} parent=5 // pred_check_branch
      %139 = sbr.rel (%p136) target = $region12
    $region11: #{deconv_block_pallas.1} parent=5 // pred_region
      %s140 = ssub.s32 %s11, 1
      // Predicated region
      $region13: #{deconv_block_pallas.1} parent=11 // pred_check
        %p141 = pneg %p58
      $region14: #{deconv_block_pallas.1} parent=11 // pred_check_branch
        %143 = sbr.rel (%p141) target = $region16
      $region15: #{deconv_block_pallas.1} parent=11 // pred_region
        _
      $region16: #{deconv_block_pallas.1} parent=11 // pred_fallthru
        _
      // Predicated region
      $region17: #{deconv_block_pallas.1} parent=11 // pred_check
        %p144 = pneg %p79
      $region18: #{deconv_block_pallas.1} parent=11 // pred_check_branch
        %146 = sbr.rel (%p144) target = $region20
      $region19: #{deconv_block_pallas.1} parent=11 // pred_region
        _
      $region20: #{deconv_block_pallas.1} parent=11 // pred_fallthru
        _
      // Predicated region
      $region21: #{deconv_block_pallas.1} parent=11 // pred_check
        %p147 = pneg %p100
      $region22: #{deconv_block_pallas.1} parent=11 // pred_check_branch
        %149 = sbr.rel (%p147) target = $region24
      $region23: #{deconv_block_pallas.1} parent=11 // pred_region
        _
      $region24: #{deconv_block_pallas.1} parent=11 // pred_fallthru
        _
    $region12: #{deconv_block_pallas.1} parent=5 // pred_fallthru
      _
    %p150 = scmp.lt.s32.totalorder %s11, 2
    // Predicated region
    $region25: #{deconv_block_pallas.1} parent=5 // pred_check
      %p151 = pneg %p150
    $region26: #{deconv_block_pallas.1} parent=5 // pred_check_branch
      %153 = sbr.rel (%p151) target = $region28
    $region27: #{deconv_block_pallas.1} parent=5 // pred_region
      // Predicated region
      $region29: #{deconv_block_pallas.1} parent=27 // pred_check
        %p154 = pneg %p31
      $region30: #{deconv_block_pallas.1} parent=27 // pred_check_branch
        %156 = sbr.rel (%p154) target = $region32
      $region31: #{deconv_block_pallas.1} parent=27 // pred_region
        %p157 = scmp.lt.s32.totalorder %s11, 1
        %s158 = scalar_select %p157, %s11, 1
        %s159 = smul.addr %s158, 2
        %s160 = smul.addr %s159, 4
        %s161 = scalar_lea.vmem %s0, %s160
      $region32: #{deconv_block_pallas.1} parent=27 // pred_fallthru
        _
    $region28: #{deconv_block_pallas.1} parent=5 // pred_fallthru
      _
    %p162 = scmp.le.s32.totalorder 1, %s11
    %p163 = scmp.lt.s32.totalorder %s11, 3
    %p164 = pnand %p162, %p163
    %p165 = pneg %p164
    // Predicated region
    $region33: #{deconv_block_pallas.1} parent=5 // pred_check
      _
    $region34: #{deconv_block_pallas.1} parent=5 // pred_check_branch
      %167 = sbr.rel (%p164) target = $region36
    $region35: #{deconv_block_pallas.1} parent=5 // pred_region
      %s168 = ssub.s32 %s11, 1
      %p169 = scmp.lt.s32.totalorder %s16, 1
      %s170 = scalar_select %p169, %s16, 1
      %s171 = smul.addr %s170, 2
      %s172 = smul.addr %s171, 4
      %s173 = scalar_lea.vmem %s0, %s172
      %p174 = pneg %p37
      %p175 = pneg %p34
      %p176 = pneg %p58
      %p177 = pneg %p55
      %p178 = pneg %p79
      %p179 = pneg %p76
      %p180 = pneg %p100
      %p181 = pneg %p97
      %p182 = pneg %p126
      %p183 = pneg %p123
      %p184 = scmp.lt.s32.totalorder %s16, 1
      %s185 = scalar_select %p184, %s16, 1
      %s186 = smul.addr %s185, 4
      %s187 = smul.addr %s186, 8
      %s188 = scalar_lea.vmem %s4, %s187
      %p189 = scmp.lt.s32.totalorder %s16, 1
      %s190 = scalar_select %p189, %s16, 1
      %s191 = smul.addr %s190, 2
      %s192 = smul.addr %s191, 4
      %s193 = scalar_lea.vmem %s0, %s192
      %p194 = scmp.lt.s32.totalorder %s16, 1
      %s195 = scalar_select %p194, %s16, 1
      %s196 = smul.addr %s195, 4
      %s197 = smul.addr %s196, 8
      %s198 = scalar_lea.vmem %s4, %s197
      %200 = vst [vmem:[#allocation2] sm:$0xff] 0.0
      %201 = vst [vmem:[#allocation2 + $0x8] sm:$0xff] 0.0
      %202 = vst [vmem:[#allocation2 + $0x10] sm:$0xff] 0.0
      %203 = vst [vmem:[#allocation2 + $0x18] sm:$0xff] 0.0
      %204 = vst [vmem:[#allocation2 + $0x20] sm:$0xff] 0.0
      %205 = vst [vmem:[#allocation2 + $0x28] sm:$0xff] 0.0
      %206 = vst [vmem:[#allocation2 + $0x30] sm:$0xff] 0.0
      %207 = vst [vmem:[#allocation2 + $0x38] sm:$0xff] 0.0
      %208 = vst [vmem:[#allocation2 + $0x40] sm:$0xff] 0.0
      %209 = vst [vmem:[#allocation2 + $0x48] sm:$0xff] 0.0
      %v210 = vld [vmem:[%s193] sm:$0xff]
      %v211 = vlaneseq
      %v212 = vand.u32 %v211, 127
      %v213 = vadd.s32 %v212, 128
      %v214 = vadd.s32 %v212, 17
      %v215 = vadd.s32 %v213, 17
      %vm216 = vcmp.lt.s32.totalorder %v214, 0
      %v217 = vsub.s32 0, %v214
      %v218 = vsel %vm216, %v217, %v214
      %v219 = vshrl.u32 %v218, 4
      %v220 = vand.u32 %v218, 15
      %v221 = vsub.s32 0, %v220
      %v222 = vsel %vm216, %v221, %v220
      %vm223 = vcmp.lt.s32.totalorder %v215, 0
      %v224 = vsub.s32 0, %v215
      %v225 = vsel %vm223, %v224, %v215
      %v226 = vshrl.u32 %v225, 4
      %v227 = vand.u32 %v225, 15
      %v228 = vsub.s32 0, %v227
      %v229 = vsel %vm223, %v228, %v227
      %vm230 = vcmp.ne.s32.totalorder %v222, 0
      %vm231 = vcmp.ne.s32.totalorder %v229, 0
      %vm232 = vcmp.lt.s32.totalorder %v222, 0
      %vm233 = vcmp.lt.s32.totalorder %v229, 0
      %vm234 = vmand %vm232, %vm230
      %vm235 = vmand %vm233, %vm231
      %v236 = vadd.s32 %v222, 16
      %v237 = vadd.s32 %v229, 16
      %v238 = vsel %vm234, %v236, %v222
      %v239 = vsel %vm235, %v237, %v229
      %v240 = vadd.s32 %v238, 4294967295
      %v241 = vadd.s32 %v239, 4294967295
      %vm242 = vcmp.ge.s32.totalorder %v240, 0
      %vm243 = vcmp.ge.s32.totalorder %v241, 0
      %vm244 = vcmp.lt.s32.totalorder %v240, 16
      %vm245 = vcmp.lt.s32.totalorder %v241, 16
      %vm246 = vmand %vm242, %vm244
      %vm247 = vmand %vm243, %vm245
      %v249 = vcombine.high %v210, %v210
      %v251 = vsel %vm246, %v210, 0.0
      %v252 = vsel %vm247, %v249, 0.0
      %255 = vrot.lane.b32.xlu0 %v251, 17
      %v256 = vpop.permute.xlu0 %255
      %257 = vrot.lane.b32.xlu0 %v252, 17
      %v258 = vpop.permute.xlu0 %257
      %vm259 = vcmask 138240
      %v260 = vsel %vm259, %v256, %v258
      %vm263 = vcmask 1043592
      %264 = vst.msk [vmem:[#allocation2] sm:$0xf] %vm263, %v256
      %265 = vst [vmem:[#allocation2 + $0x8] sm:$0xf] %v260
      %v266 = vld [vmem:[%s193] sm:$0xff]
      %v268 = vcombine.low %v266, %v266
      %269 = vrot.lane.b32.xlu0 %v268, 16
      %v270 = vpop.permute.xlu0 %269
      %271 = vrot.lane.b32.xlu0 %v266, 16
      %v272 = vpop.permute.xlu0 %271
      %vm273 = vcmask 130048
      %v274 = vsel %vm273, %v270, %v272
      %vm277 = vcmask 1047684
      %278 = vst.msk [vmem:[#allocation2] sm:$0xf0] %vm277, %v270
      %279 = vst [vmem:[#allocation2 + $0x8] sm:$0xf0] %v274
      %v280 = vld [vmem:[%s193] sm:$0xff]
      %v281 = vadd.s32 %v212, 15
      %v282 = vadd.s32 %v213, 15
      %vm283 = vcmp.lt.s32.totalorder %v281, 0
      %v284 = vsub.s32 0, %v281
      %v285 = vsel %vm283, %v284, %v281
      %v286 = vshrl.u32 %v285, 4
      %v287 = vand.u32 %v285, 15
      %v288 = vsub.s32 0, %v287
      %v289 = vsel %vm283, %v288, %v287
      %vm290 = vcmp.lt.s32.totalorder %v282, 0
      %v291 = vsub.s32 0, %v282
      %v292 = vsel %vm290, %v291, %v282
      %v293 = vshrl.u32 %v292, 4
      %v294 = vand.u32 %v292, 15
      %v295 = vsub.s32 0, %v294
      %v296 = vsel %vm290, %v295, %v294
      %vm297 = vcmp.ne.s32.totalorder %v289, 0
      %vm298 = vcmp.ne.s32.totalorder %v296, 0
      %vm299 = vcmp.lt.s32.totalorder %v289, 0
      %vm300 = vcmp.lt.s32.totalorder %v296, 0
      %vm301 = vmand %vm299, %vm297
      %vm302 = vmand %vm300, %vm298
      %v303 = vadd.s32 %v289, 16
      %v304 = vadd.s32 %v296, 16
      %v305 = vsel %vm301, %v303, %v289
      %v306 = vsel %vm302, %v304, %v296
      %v307 = vadd.s32 %v305, 1
      %v308 = vadd.s32 %v306, 1
      %vm309 = vcmp.ge.s32.totalorder %v307, 0
      %vm310 = vcmp.ge.s32.totalorder %v308, 0
      %vm311 = vcmp.lt.s32.totalorder %v307, 16
      %vm312 = vcmp.lt.s32.totalorder %v308, 16
      %vm313 = vmand %vm309, %vm311
      %vm314 = vmand %vm310, %vm312
      %v316 = vcombine.high %v280, %v280
      %v318 = vsel %vm313, %v280, 0.0
      %v319 = vsel %vm314, %v316, 0.0
      %322 = vrot.lane.b32.xlu0 %v318, 15
      %v323 = vpop.permute.xlu0 %322
      %324 = vrot.lane.b32.xlu0 %v319, 15
      %v325 = vpop.permute.xlu0 %324
      %vm326 = vcmask 121856
      %v327 = vsel %vm326, %v323, %v325
      %vm330 = vcmask 1043576
      %331 = vst.msk [vmem:[#allocation2 + $0x10] sm:$0xf] %vm330, %v323
      %332 = vst [vmem:[#allocation2 + $0x18] sm:$0xf] %v327
      %v333 = vld [vmem:[%s193] sm:$0xff]
      %v334 = vadd.s32 %v212, 1
      %v335 = vadd.s32 %v213, 1
      %vm336 = vcmp.lt.s32.totalorder %v334, 0
      %v337 = vsub.s32 0, %v334
      %v338 = vsel %vm336, %v337, %v334
      %v339 = vshrl.u32 %v338, 4
      %v340 = vand.u32 %v338, 15
      %v341 = vsub.s32 0, %v340
      %v342 = vsel %vm336, %v341, %v340
      %vm343 = vcmp.lt.s32.totalorder %v335, 0
      %v344 = vsub.s32 0, %v335
      %v345 = vsel %vm343, %v344, %v335
      %v346 = vshrl.u32 %v345, 4
      %v347 = vand.u32 %v345, 15
      %v348 = vsub.s32 0, %v347
      %v349 = vsel %vm343, %v348, %v347
      %vm350 = vcmp.ne.s32.totalorder %v342, 0
      %vm351 = vcmp.ne.s32.totalorder %v349, 0
      %vm352 = vcmp.lt.s32.totalorder %v342, 0
      %vm353 = vcmp.lt.s32.totalorder %v349, 0
      %vm354 = vmand %vm352, %vm350
      %vm355 = vmand %vm353, %vm351
      %v356 = vadd.s32 %v342, 16
      %v357 = vadd.s32 %v349, 16
      %v358 = vsel %vm354, %v356, %v342
      %v359 = vsel %vm355, %v357, %v349
      %v360 = vadd.s32 %v358, 4294967295
      %v361 = vadd.s32 %v359, 4294967295
      %vm362 = vcmp.ge.s32.totalorder %v360, 0
      %vm363 = vcmp.ge.s32.totalorder %v361, 0
      %vm364 = vcmp.lt.s32.totalorder %v360, 16
      %vm365 = vcmp.lt.s32.totalorder %v361, 16
      %vm366 = vmand %vm362, %vm364
      %vm367 = vmand %vm363, %vm365
      %v369 = vcombine.high %v333, %v333
      %v371 = vsel %vm366, %v333, 0.0
      %v372 = vsel %vm367, %v369, 0.0
      %v375 = vrot.slane %v371, 4
      %v376 = vrot.slane %v372, 4
      %377 = vrot.lane.b32.xlu0 %v375, 1
      %v378 = vpop.permute.xlu0 %377
      %379 = vrot.lane.b32.xlu0 %v376, 1
      %v380 = vpop.permute.xlu0 %379
      %vm381 = vcmask 7168
      %v382 = vsel %vm381, %v378, %v380
      %vm385 = vcmask 1047564
      %386 = vst.msk [vmem:[#allocation2 + $0x10] sm:$0xf0] %vm385, %v378
      %387 = vst [vmem:[#allocation2 + $0x18] sm:$0xf0] %v382
      %v388 = vld [vmem:[%s193] sm:$0xff]
      %v390 = vcombine.high %v388, %v388
      %392 = vst [vmem:[#allocation2 + $0x20] sm:$0xf] %v388
      %393 = vst [vmem:[#allocation2 + $0x28] sm:$0xf] %v390
      %v394 = vld [vmem:[%s193] sm:$0xff]
      %vm395 = vcmp.lt.s32.totalorder %v212, 0
      %v396 = vsub.s32 0, %v212
      %v397 = vsel %vm395, %v396, %v212
      %v398 = vshrl.u32 %v397, 4
      %v399 = vand.u32 %v397, 15
      %v400 = vsub.s32 0, %v399
      %v401 = vsel %vm395, %v400, %v399
      %vm402 = vcmp.lt.s32.totalorder %v213, 0
      %v403 = vsub.s32 0, %v213
      %v404 = vsel %vm402, %v403, %v213
      %v405 = vshrl.u32 %v404, 4
      %v406 = vand.u32 %v404, 15
      %v407 = vsub.s32 0, %v406
      %v408 = vsel %vm402, %v407, %v406
      %vm409 = vcmp.ne.s32.totalorder %v401, 0
      %vm410 = vcmp.ne.s32.totalorder %v408, 0
      %vm411 = vcmp.lt.s32.totalorder %v401, 0
      %vm412 = vcmp.lt.s32.totalorder %v408, 0
      %vm413 = vmand %vm411, %vm409
      %vm414 = vmand %vm412, %vm410
      %v415 = vadd.s32 %v401, 16
      %v416 = vadd.s32 %v408, 16
      %v417 = vsel %vm413, %v415, %v401
      %v418 = vsel %vm414, %v416, %v408
      %v419 = vadd.s32 %v417, 1
      %v420 = vadd.s32 %v418, 1
      %vm421 = vcmp.ge.s32.totalorder %v419, 0
      %vm422 = vcmp.ge.s32.totalorder %v420, 0
      %vm423 = vcmp.lt.s32.totalorder %v419, 16
      %vm424 = vcmp.lt.s32.totalorder %v420, 16
      %vm425 = vmand %vm421, %vm423
      %vm426 = vmand %vm422, %vm424
      %v428 = vcombine.high %v394, %v394
      %429 = vrot.lane.b32.xlu0 %v394, 127
      %v430 = vpop.permute.xlu0 %429
      %431 = vrot.lane.b32.xlu0 %v428, 127
      %v432 = vpop.permute.xlu0 %431
      %vm433 = vcmask 1039360
      %v434 = vsel %vm433, %v430, %v432
      %v437 = vsel %vm425, %v434, 0.0
      %v438 = vsel %vm426, %v432, 0.0
      %v441 = vrot.slane %v437, 4
      %v442 = vrot.slane %v438, 4
      %445 = vst [vmem:[#allocation2 + $0x20] sm:$0xf0] %v441
      %vm446 = vcmask 1039364
      %447 = vst.msk [vmem:[#allocation2 + $0x28] sm:$0xf0] %vm446, %v442
      %v448 = vld [vmem:[%s193] sm:$0xff]
      %v449 = vadd.s32 %v417, 4294967295
      %v450 = vadd.s32 %v418, 4294967295
      %vm451 = vcmp.ge.s32.totalorder %v449, 0
      %vm452 = vcmp.ge.s32.totalorder %v450, 0
      %vm453 = vcmp.lt.s32.totalorder %v449, 16
      %vm454 = vcmp.lt.s32.totalorder %v450, 16
      %vm455 = vmand %vm451, %vm453
      %vm456 = vmand %vm452, %vm454
      %v458 = vcombine.high %v448, %v448
      %459 = vrot.lane.b32.xlu0 %v448, 113
      %v460 = vpop.permute.xlu0 %459
      %461 = vrot.lane.b32.xlu0 %v458, 113
      %v462 = vpop.permute.xlu0 %461
      %vm463 = vcmask 924672
      %v464 = vsel %vm463, %v460, %v462
      %v467 = vsel %vm455, %v464, 0.0
      %v468 = vsel %vm456, %v462, 0.0
      %469 = vst [vmem:[#allocation2 + $0x30] sm:$0xf] %v467
      %vm470 = vcmask 920576
      %471 = vst.msk [vmem:[#allocation2 + $0x38] sm:$0xf] %vm470, %v468
      %v472 = vld [vmem:[%s193] sm:$0xff]
      %v474 = vcombine.low %v472, %v472
      %475 = vrot.lane.b32.xlu0 %v474, 112
      %v476 = vpop.permute.xlu0 %475
      %477 = vrot.lane.b32.xlu0 %v472, 112
      %v478 = vpop.permute.xlu0 %477
      %vm479 = vcmask 916480
      %v480 = vsel %vm479, %v476, %v478
      %483 = vst [vmem:[#allocation2 + $0x30] sm:$0xf0] %v480
      %vm484 = vcmask 916484
      %485 = vst.msk [vmem:[#allocation2 + $0x38] sm:$0xf0] %vm484, %v478
      %v486 = vld [vmem:[%s193] sm:$0xff]
      %v488 = vcombine.high %v486, %v486
      %489 = vrot.lane.b32.xlu0 %v486, 111
      %v490 = vpop.permute.xlu0 %489
      %491 = vrot.lane.b32.xlu0 %v488, 111
      %v492 = vpop.permute.xlu0 %491
      %vm493 = vcmask 908288
      %v494 = vsel %vm493, %v490, %v492
      %v497 = vsel %vm425, %v494, 0.0
      %v498 = vsel %vm426, %v492, 0.0
      %499 = vst [vmem:[#allocation2 + $0x40] sm:$0xf] %v497
      %vm500 = vcmask 904192
      %501 = vst.msk [vmem:[#allocation2 + $0x48] sm:$0xf] %vm500, %v498
      %v502 = vld [vmem:[#allocation2] sm:$0xff]
      %v503 = vld [vmem:[#allocation2 + $0x8] sm:$0xff]
      %v504 = vld [vmem:[#allocation2 + $0x10] sm:$0xff]
      %v505 = vld [vmem:[#allocation2 + $0x18] sm:$0xff]
      %v506 = vld [vmem:[#allocation2 + $0x20] sm:$0xff]
      %v507 = vld [vmem:[#allocation2 + $0x28] sm:$0xff]
      %v508 = vld [vmem:[#allocation2 + $0x30] sm:$0xff]
      %v509 = vld [vmem:[#allocation2 + $0x38] sm:$0xff]
      %v510 = vld [vmem:[#allocation2 + $0x40] sm:$0xff]
      %v511 = vld [vmem:[#allocation2 + $0x48] sm:$0xff]
      %v512 = vpack.c.bf16 %v504, %v502
      %v513 = vpack.c.bf16 %v505, %v503
      %v514 = vpack.c.bf16 %v508, %v506
      %v515 = vpack.c.bf16 %v509, %v507
      %v516 = vpack.c.bf16 %v510, %v510
      %v517 = vpack.c.bf16 %v511, %v511
      %v518 = vld [vmem:[%s1] sm:$0xf]
      %v519 = vld [vmem:[%s1 + $0x4] sm:$0xf]
      %v520 = vld [vmem:[%s2] sm:$0xff]
      %v521 = vld [vmem:[%s2 + $0x8] sm:$0xff]
      %523 = vset.pattern.permute.xlu0 0
      %524 = vperm.xlu0 %523, %v520
      %v525 = vpop.permute.xlu0 %524
      %528 = vset.pattern.permute.xlu0 0
      %529 = vperm.xlu0 %528, %v521
      %v530 = vpop.permute.xlu0 %529
      %v534 = vunpack.c.l.b16 %v518
      %v535 = vunpack.c.l.b16 %v519
      %v536 = vpack.c.b16 %v535, %v534
      %vm537 = vcmask 326656
      %v539 = vsel %vm537, %v536, 0
      %vm541 = vcmask 1043456
      %v543 = vsel %vm541, %v516, 0
      %v546 = vsel %vm541, %v517, 0
      %548 = vmatprep.subr.bf16.mxu0 %v513
      %549 = vmatpush1.bf16.msra.mxu0 %v512
      %550 = vmatprep.subr.bf16.mxu0 %v515
      %551 = vmatpush1.bf16.msra.mxu0 %v514
      %552 = vmatprep.subr.bf16.mxu0 %v546
      %553 = vmatpush1.bf16.msra.mxu0 %v543
      %554 = vmatprep.subr.bf16.mxu0 0
      %555 = vmatpush1.bf16.msra.mxu0 0
      %556 = vmatprep.subr.bf16.mxu0 0
      %557 = vmatpush1.bf16.msra.mxu0 0
      %558 = vmatprep.subr.bf16.mxu0 0
      %559 = vmatpush1.bf16.msra.mxu0 0
      %560 = vmatprep.subr.bf16.mxu0 0
      %561 = vmatpush1.bf16.msra.mxu0 0
      %562 = vmatprep.subr.bf16.mxu0 0
      %563 = vmatpush1.bf16.msra.mxu0 0
      %564 = vmatprep.subr.bf16.mxu0 0
      %565 = vmatpush1.bf16.msra.mxu0 0
      %566 = vmatprep.subr.bf16.mxu0 0
      %567 = vmatpush1.bf16.msra.mxu0 0
      %568 = vmatprep.subr.bf16.mxu0 0
      %569 = vmatpush1.bf16.msra.mxu0 0
      %570 = vmatprep.subr.bf16.mxu0 0
      %571 = vmatpush1.bf16.msra.mxu0 0
      %572 = vmatprep.subr.bf16.mxu0 0
      %573 = vmatpush1.bf16.msra.mxu0 0
      %574 = vmatprep.subr.bf16.mxu0 0
      %575 = vmatpush1.bf16.msra.mxu0 0
      %576 = vmatprep.subr.bf16.mxu0 0
      %577 = vmatpush1.bf16.msra.mxu0 0
      %578 = vmatprep.subr.bf16.mxu0 0
      %579 = vmatpush1.bf16.msra.mxu0 0
      %580 = vmatprep.mubr.bf16.mxu0 0
      %581 = vmatmul.mubr.bf16.gmra.mrb[0].mxu0 %v539
      %v582 = vpop.f32.mrb[0].mxu0
      %v583 = vadd.f32 %v525, %v582
      %v584 = vpop.f32.mrb[0].mxu0
      %v585 = vadd.f32 %v525, %v584
      %v586 = vpop.f32.mrb[0].mxu0
      %v587 = vadd.f32 %v530, %v586
      %v588 = vpop.f32.mrb[0].mxu0
      %v589 = vadd.f32 %v530, %v588
      %590 = vdwg.mxu0
      %s591 = sld [smem:[#allocation3]]
      %vm592 = vcmp.ge.f32.partialorder %v583, 0.0
      %vm593 = vcmp.ge.f32.partialorder %v585, 0.0
      %vm594 = vcmp.ge.f32.partialorder %v587, 0.0
      %vm595 = vcmp.ge.f32.partialorder %v589, 0.0
      %v596 = vstv %s591
      %v597 = vmul.f32 %v596, %v583
      %v598 = vmul.f32 %v596, %v585
      %v599 = vmul.f32 %v596, %v587
      %v600 = vmul.f32 %v596, %v589
      %v601 = vsel %vm592, %v583, %v597
      %v602 = vsel %vm593, %v585, %v598
      %v603 = vsel %vm594, %v587, %v599
      %v604 = vsel %vm595, %v589, %v600
      %605 = vst [vmem:[%s198] sm:$0xff] %v601
      %606 = vst [vmem:[%s198 + $0x8] sm:$0xff] %v602
      %607 = vst [vmem:[%s198 + $0x10] sm:$0xff] %v603
      %608 = vst [vmem:[%s198 + $0x18] sm:$0xff] %v604
      %p609 = scmp.lt.s32.totalorder %s16, 1
      %s610 = scalar_select %p609, %s16, 1
      %s611 = smul.addr %s610, 4
      %s612 = smul.addr %s611, 8
      %s613 = scalar_lea.vmem %s4, %s612
      // Predicated region
      $region37: #{deconv_block_pallas.1} parent=35 // pred_check
        %p614 = pneg %p123
      $region38: #{deconv_block_pallas.1} parent=35 // pred_check_branch
        %616 = sbr.rel (%p614) target = $region40
      $region39: #{deconv_block_pallas.1} parent=35 // pred_region
        _
      $region40: #{deconv_block_pallas.1} parent=35 // pred_fallthru
        _
    $region36: #{deconv_block_pallas.1} parent=5 // pred_fallthru
      _
    %p617 = scmp.le.s32.totalorder 2, %s11
    // Predicated region
    $region41: #{deconv_block_pallas.1} parent=5 // pred_check
      %p618 = pneg %p617
    $region42: #{deconv_block_pallas.1} parent=5 // pred_check_branch
      %620 = sbr.rel (%p618) target = $region44
    $region43: #{deconv_block_pallas.1} parent=5 // pred_region
      %s621 = ssub.s32 %s11, 2
      // Predicated region
      $region45: #{deconv_block_pallas.1} parent=43 // pred_check
        %p622 = pneg %p129
      $region46: #{deconv_block_pallas.1} parent=43 // pred_check_branch
        %624 = sbr.rel (%p622) target = $region48
      $region47: #{deconv_block_pallas.1} parent=43 // pred_region
        %p625 = scmp.lt.s32.totalorder %s17, 1
        %s626 = scalar_select %p625, %s17, 1
        %s627 = smul.addr %s626, 4
        %s628 = smul.addr %s627, 8
        %s629 = scalar_lea.vmem %s4, %s628
      $region48: #{deconv_block_pallas.1} parent=43 // pred_fallthru
        _
    $region44: #{deconv_block_pallas.1} parent=5 // pred_fallthru
      _
  $region6: #{deconv_block_pallas.1} parent=0 // loop_footer
    %s15 = sadd.s32 1, %s11
  $region7: #{deconv_block_pallas.1} parent=0 // loop_footer_branch
    %10 = sbr.rel target = $region3
  $region8: #{deconv_block_pallas.1} parent=0 // loop_exit
    _

</llo_original>
